<compile_context>
chip_gen: v5e
topology: v5e:2x2
jax: 0.10.0
libtpu: 0.0.40
codegen_flags: <defaults>
</compile_context>

<pallas_src>
import jax
import jax.numpy as jnp
import numpy as np
from jax.experimental import pallas as pl
from jax.experimental.pallas import tpu as pltpu


# ----------------------------- hyperparameters ------------------------------
B = 2                                  # batch
NUM_EMBEDDING = (4, 8, 2, 2)           # (snp vocab, num positions, loc one-hot vocab, var one-hot vocab)
EMBEDDING_DIM = (16, 16, 8, 8)         # (snp, positional, loc, var)
ATTN_HIDDEN = 32
MLP_HIDDEN = (32, 16, 32)              # (fc1 out, fc2 out / deep, wide base)
MAX_LOC = 5
MAX_VAR = 3

S = NUM_EMBEDDING[1]                   # sequence length == positional vocab == fc1 input (8)
E = EMBEDDING_DIM[0]                   # 16
A = ATTN_HIDDEN                        # 32
H0, H1 = MLP_HIDDEN[0], MLP_HIDDEN[1]  # 32, 16
W8 = MLP_HIDDEN[2] // 8                # each wide model output (4)
WIDE = 2 * W8
DEEP = H1
LOC_IN = (MAX_LOC + 1) * EMBEDDING_DIM[2]   # 48
VAR_IN = (MAX_VAR + 1) * EMBEDDING_DIM[3]   # 32
WIDE_IN = LOC_IN + VAR_IN                   # 80
WD = WIDE + DEEP

# ------------------------- packed weight-slab row layout ---------------------
# weight slab: (W_ROWS, 128) f32
R_AW1 = 0                 # rows 0..16  : augmented attn_fc1 weight (E+1, A+1)
                          #               rows 0..15 cols 0..A-1 = aw1, col A = 1/E
                          #               row  16    cols 0..A-1 = ab1, col A = 0
R_AW2 = 17                # row 17      : attn_fc2 weight transposed (A,)
R_FC1W = 24               # rows 24..31 : fc1 weight (S, H0)
R_FC1B = 32               # row 32      : fc1 bias   (H0,)
R_FC2W = 40               # rows 40..71 : fc2 weight (H0, H1)
R_FC2B = 72               # row 72      : fc2 bias   (H1,)
R_WDEEP = 73              # row 73      : head weight for deep part (H1,)
R_WWIDE = 74              # row 74      : folded wide head weight (WIDE_IN,)
R_HB = 75                 # row 75 col 0: folded head bias scalar
W_ROWS = 80

OUT_ROWS = 8              # padded output: full (8,128) vreg, host slices [0:B]
OUT_COLS = 128            # cols [0:S] = attn, col S = result, rest zero


# --------------------------------- kernel -----------------------------------
def model_kernel(x_ref, wide_ref, w_ref, out_ref):
    x_aug = x_ref[...]                                      # (B*S, E+1) [x | 1]
    wide_act = wide_ref[...]                                # (B, WIDE_IN)

    # ---- attention + pooled-mean in ONE MXU pass -----------------------------
    aw1_aug = w_ref[R_AW1:R_AW1 + E + 1, 0:A + 1]           # (E+1, A+1)
    aw2 = w_ref[R_AW2:R_AW2 + 1, 0:A]                       # (1, A)
    ha = jnp.dot(x_aug, aw1_aug, preferred_element_type=jnp.float32)   # (B*S, A+1)
    ha3 = ha.reshape(B, S, A + 1)                           # leading-dim split: layout no-op
    h3 = jnp.maximum(ha3[:, :, 0:A], 0.0)                   # (B, S, A)  = relu(attn_fc1(x))
    meanx = jnp.sum(ha3[:, :, A:], axis=-1)                 # (B, S)     = mean_e(x)

    # attn_fc2 (k=1) as a VPU multiply + lane reduce; ab2 is dead under softmax.
    logits = jnp.sum(h3 * aw2, axis=-1)                     # (B, S)

    # softmax over S (dim=1); EUP approx reciprocal + one Newton-Raphson step.
    m = jnp.max(logits, axis=1, keepdims=True)
    e = jnp.exp(logits - m)
    denom = jnp.sum(e, axis=1, keepdims=True)
    r = pl.reciprocal(denom, approx=True)
    r = r * (2.0 - denom * r)                               # ~1e-7 relative error
    attn = e * r                                            # (B, S)

    # ---- context + AvgPool2d((1,E)):  mean_e(x*attn) == attn * mean_e(x) ----
    pooled = attn * meanx                                   # (B, S)

    # ---- deep path ----
    fc1w = w_ref[R_FC1W:R_FC1W + S, 0:H0]
    fc1b = w_ref[R_FC1B:R_FC1B + 1, 0:H0]
    fc1 = jnp.maximum(
        jnp.dot(pooled, fc1w, preferred_element_type=jnp.float32) + fc1b, 0.0)   # (B, H0)
    fc2w = w_ref[R_FC2W:R_FC2W + H0, 0:H1]
    fc2b = w_ref[R_FC2B:R_FC2B + 1, 0:H1]
    fc2 = jnp.maximum(
        jnp.dot(fc1, fc2w, preferred_element_type=jnp.float32) + fc2b, 0.0)      # (B, H1)

    # ---- wide & deep head (wide paths folded into weights host-side) --------
    w_wide = w_ref[R_WWIDE:R_WWIDE + 1, 0:WIDE_IN]          # (1, WIDE_IN)
    w_deep = w_ref[R_WDEEP:R_WDEEP + 1, 0:H1]               # (1, H1)
    hb = w_ref[R_HB:R_HB + 1, 0:1]                          # (1, 1) folded head bias
    res = (jnp.sum(wide_act * w_wide, axis=-1, keepdims=True)
           + jnp.sum(fc2 * w_deep, axis=-1, keepdims=True)
           + hb)                                            # (B, 1)

    # ---- single unmasked store: attn in cols [0:S], result in col S ---------
    row = jnp.concatenate(
        [attn, res, jnp.zeros((B, OUT_COLS - S - 1), jnp.float32)], axis=1)      # (B, 128)
    out_ref[...] = jnp.concatenate(
        [row, jnp.zeros((OUT_ROWS - B, OUT_COLS), jnp.float32)], axis=0)         # (8, 128)


# ------------------------------- wrapper -------------------------------------
@jax.jit
def model_forward(x, loc_flat, var_flat, w_slab):
    """x: (B,S,E) f32 summed embeddings; loc_flat/var_flat: flattened one-hot embeddings."""
    # Glue (fused by XLA): append a ones column so ab1 folds into the matmul,
    # and concat the two wide-model activations.
    x_aug = jnp.concatenate(
        [x.reshape(B * S, E), jnp.ones((B * S, 1), jnp.float32)], axis=1)   # (B*S, E+1)
    wide = jnp.concatenate([loc_flat, var_flat], axis=1)                    # (B, WIDE_IN)

    out = pl.pallas_call(
        model_kernel,
        out_shape=jax.ShapeDtypeStruct((OUT_ROWS, OUT_COLS), jnp.float32),
        in_specs=[
            pl.BlockSpec(memory_space=pltpu.MemorySpace.VMEM),   # x_aug   (B*S, E+1)
            pl.BlockSpec(memory_space=pltpu.MemorySpace.VMEM),   # wide    (B, WIDE_IN)
            pl.BlockSpec(memory_space=pltpu.MemorySpace.VMEM),   # weights (W_ROWS, 128)
        ],
        out_specs=pl.BlockSpec(memory_space=pltpu.MemorySpace.VMEM),
    )(x_aug, wide, w_slab)
    # Rows B..7 and cols S+1..127 are zero pad; only [0:B, 0:S] and [0:B, S] are meaningful.
    return out[0:B, 0:S], out[0:B, S]      # attention (B,S), result (B,)


# ------------------------------ param / input setup --------------------------
def make_params(key):
    ks = jax.random.split(key, 16)
    n = iter(range(16))
    norm = lambda k, shp, scale=1.0: (scale * jax.random.normal(k, shp)).astype(jnp.float32)
    p = {}
    # attention (xavier-normal-ish scale for fc weights, normal biases)
    p['aw1'] = norm(ks[next(n)], (E, A), np.sqrt(2.0 / (E + A)) * np.sqrt(2.0))
    p['ab1'] = norm(ks[next(n)], (1, A))
    p['aw2'] = norm(ks[next(n)], (A, 1), np.sqrt(2.0 / (A + 1)) * np.sqrt(2.0))
    p['ab2'] = norm(ks[next(n)], (1, 1))
    # deep MLP (torch init.normal_)
    p['fc1w'] = norm(ks[next(n)], (S, H0))
    p['fc1b'] = norm(ks[next(n)], (1, H0))
    p['fc2w'] = norm(ks[next(n)], (H0, H1))
    p['fc2b'] = norm(ks[next(n)], (1, H1))
    # wide models
    p['locw'] = norm(ks[next(n)], (LOC_IN, W8), 1.0 / np.sqrt(LOC_IN))
    p['locb'] = norm(ks[next(n)], (1, W8), 1.0 / np.sqrt(LOC_IN))
    p['varw'] = norm(ks[next(n)], (VAR_IN, W8), 1.0 / np.sqrt(VAR_IN))
    p['varb'] = norm(ks[next(n)], (1, W8), 1.0 / np.sqrt(VAR_IN))
    # wide&deep head
    p['wdw'] = norm(ks[next(n)], (WD, 1), 1.0 / np.sqrt(WD))
    p['wdb'] = norm(ks[next(n)], (1, 1), 1.0 / np.sqrt(WD))
    # embedding tables (torch init.normal_)
    p['snp_emb'] = norm(ks[next(n)], (NUM_EMBEDDING[0], EMBEDDING_DIM[0]))
    p['pos_emb'] = norm(ks[next(n)], (NUM_EMBEDDING[1], EMBEDDING_DIM[1]))
    return p


def pack_params(params):
    """One-time host-side weight folding + packing into a (W_ROWS,128) slab."""
    wdw = params['wdw']
    # fold the (linear, no-activation) wide paths into the head
    w_loc_f = params['locw'] @ wdw[0:W8]                    # (LOC_IN, 1)
    w_var_f = params['varw'] @ wdw[W8:2 * W8]               # (VAR_IN, 1)
    w_wide = jnp.concatenate([w_loc_f, w_var_f], axis=0)[:, 0]   # (WIDE_IN,)
    head_bias = (params['locb'] @ wdw[0:W8]
                 + params['varb'] @ wdw[W8:2 * W8]
                 + params['wdb'])[0, 0]                     # scalar
    w_deep = wdw[2 * W8:WD, 0]                              # (H1,)

    w = jnp.zeros((W_ROWS, 128), jnp.float32)
    # augmented attention block: [aw1 | 1/E ; ab1 | 0]  -> (E+1, A+1)
    w = w.at[R_AW1:R_AW1 + E, 0:A].set(params['aw1'])
    w = w.at[R_AW1:R_AW1 + E, A].set(1.0 / E)
    w = w.at[R_AW1 + E, 0:A].set(params['ab1'][0])
    w = w.at[R_AW2, 0:A].set(params['aw2'][:, 0])
    w = w.at[R_FC1W:R_FC1W + S, 0:H0].set(params['fc1w'])
    w = w.at[R_FC1B, 0:H0].set(params['fc1b'][0])
    w = w.at[R_FC2W:R_FC2W + H0, 0:H1].set(params['fc2w'])
    w = w.at[R_FC2B, 0:H1].set(params['fc2b'][0])
    w = w.at[R_WDEEP, 0:H1].set(w_deep)
    w = w.at[R_WWIDE, 0:WIDE_IN].set(w_wide)
    w = w.at[R_HB, 0].set(head_bias)
    return w


def make_embed_tables(key):
    k1, k2 = jax.random.split(key)
    loc_emb = jax.random.normal(k1, (NUM_EMBEDDING[2], EMBEDDING_DIM[2])).astype(jnp.float32)
    var_emb = jax.random.normal(k2, (NUM_EMBEDDING[3], EMBEDDING_DIM[3])).astype(jnp.float32)
    return loc_emb, var_emb


def one_hot_int(idx, num_classes):
    return (jnp.arange(num_classes)[None, :] == idx[:, None]).astype(jnp.int32)


def reference_forward(params, loc_emb, var_emb, snp, snp_pos, sample_loc, sample_var):
    """Pure-JAX reference mirroring the PyTorch forward (unfolded)."""
    x = params['snp_emb'][snp] + params['pos_emb'][snp_pos]                 # (B,S,E)
    h = jax.nn.relu(jnp.einsum('bse,ea->bsa', x, params['aw1']) + params['ab1'])
    logits = jnp.einsum('bsa,ak->bsk', h, params['aw2'])[..., 0] + params['ab2'][0, 0]
    a = jax.nn.softmax(logits, axis=1)                                      # (B,S)
    pooled = jnp.mean(x * a[:, :, None], axis=-1)                           # AvgPool2d((1,E))
    fc1 = jax.nn.relu(pooled @ params['fc1w'] + params['fc1b'])
    fc2 = jax.nn.relu(fc1 @ params['fc2w'] + params['fc2b'])
    loc_flat = loc_emb[one_hot_int(sample_loc, MAX_LOC + 1)].reshape(B, -1)
    var_flat = var_emb[one_hot_int(sample_var, MAX_VAR + 1)].reshape(B, -1)
    wm1 = loc_flat @ params['locw'] + params['locb']
    wm2 = var_flat @ params['varw'] + params['varb']
    wd = jnp.concatenate([wm1, wm2, fc2], axis=1)
    res = (wd @ params['wdw'] + params['wdb'])[:, 0]
    return a, res


if __name__ == "__main__":
    key = jax.random.PRNGKey(0)
    kp, ke, k_snp, k_loc, k_var = jax.random.split(key, 5)

    params = make_params(kp)
    loc_emb, var_emb = make_embed_tables(ke)

    # inputs
    snp = jax.random.randint(k_snp, (B, S), 0, NUM_EMBEDDING[0])            # (B, S) int
    snp_pos = jnp.broadcast_to(jnp.arange(S, dtype=jnp.int32), (B, S))      # (B, S) int
    sample_loc = jax.random.randint(k_loc, (B,), 0, MAX_LOC + 1)            # (B,) int
    sample_var = jax.random.randint(k_var, (B,), 0, MAX_VAR + 1)            # (B,) int

    # glue: embedding gathers + one-hot flattening + one-time weight fold/pack
    x = params['snp_emb'][snp] + params['pos_emb'][snp_pos]                 # (B, S, E) f32
    loc_flat = loc_emb[one_hot_int(sample_loc, MAX_LOC + 1)].reshape(B, -1) # (B, LOC_IN)
    var_flat = var_emb[one_hot_int(sample_var, MAX_VAR + 1)].reshape(B, -1) # (B, VAR_IN)
    w_slab = pack_params(params)

    a_out, result = model_forward(x, loc_flat, var_flat, w_slab)
    jax.block_until_ready((a_out, result))

    # correctness check against pure-JAX reference of the PyTorch forward
    a_ref, r_ref = reference_forward(params, loc_emb, var_emb, snp, snp_pos,
                                     sample_loc, sample_var)
    np.testing.assert_allclose(np.asarray(a_out), np.asarray(a_ref), rtol=1e-4, atol=1e-4)
    np.testing.assert_allclose(np.asarray(result), np.asarray(r_ref), rtol=1e-4, atol=1e-4)

    print("KERNEL_OK")
</pallas_src>

<mosaic_0001>
module attributes {stable_mosaic.version = 11 : i64} {
  func.func @model_kernel(%arg0: memref<16x17xf32, #tpu.memory_space<vmem>>, %arg1: memref<2x80xf32, #tpu.memory_space<vmem>>, %arg2: memref<80x128xf32, #tpu.memory_space<vmem>>, %arg3: memref<8x128xf32, #tpu.memory_space<vmem>>) attributes {dimension_semantics = [], scalar_prefetch = 0 : i64, scratch_operands = 0 : i64, tpu.core_type = #tpu.core_type<tc>} {
    %c0 = arith.constant 0 : index
    %c0_0 = arith.constant 0 : index
    %0 = vector.load %arg0[%c0, %c0_0] : memref<16x17xf32, #tpu.memory_space<vmem>>, vector<16x17xf32>
    %c0_1 = arith.constant 0 : index
    %c0_2 = arith.constant 0 : index
    %1 = vector.load %arg1[%c0_1, %c0_2] : memref<2x80xf32, #tpu.memory_space<vmem>>, vector<2x80xf32>
    %c0_3 = arith.constant 0 : index
    %c0_4 = arith.constant 0 : index
    %2 = vector.load %arg2[%c0_3, %c0_4] : memref<80x128xf32, #tpu.memory_space<vmem>>, vector<17x33xf32>
    %c17 = arith.constant 17 : index
    %c0_5 = arith.constant 0 : index
    %3 = vector.load %arg2[%c17, %c0_5] : memref<80x128xf32, #tpu.memory_space<vmem>>, vector<1x32xf32>
    %cst = arith.constant dense<0.000000e+00> : vector<16x33xf32>
    %4 = tpu.matmul %0, %2, %cst {dimension_numbers = #tpu.dot_dimension_numbers<[1], [0], [0], [1], [0, 0, 1, 1], [], []>} : vector<16x17xf32>, vector<17x33xf32>, vector<16x33xf32> -> vector<16x33xf32>
    %5 = vector.shape_cast %4 : vector<16x33xf32> to vector<2x8x33xf32>
    %6 = vector.extract_strided_slice %5 {offsets = [0, 0, 0], sizes = [2, 8, 32], strides = [1, 1, 1]} : vector<2x8x33xf32> to vector<2x8x32xf32>
    %cst_6 = arith.constant 0.000000e+00 : f32
    %7 = vector.broadcast %cst_6 : f32 to vector<2x8x32xf32>
    %8 = arith.maximumf %6, %7 : vector<2x8x32xf32>
    %9 = vector.extract_strided_slice %5 {offsets = [0, 0, 32], sizes = [2, 8, 1], strides = [1, 1, 1]} : vector<2x8x33xf32> to vector<2x8x1xf32>
    %cst_7 = arith.constant dense<0.000000e+00> : vector<2x8xf32>
    %10 = vector.multi_reduction <add>, %9, %cst_7 [2] : vector<2x8x1xf32> to vector<2x8xf32>
    %11 = vector.shape_cast %3 : vector<1x32xf32> to vector<1x1x32xf32>
    %12 = vector.broadcast %11 : vector<1x1x32xf32> to vector<2x8x32xf32>
    %13 = arith.mulf %8, %12 : vector<2x8x32xf32>
    %cst_8 = arith.constant dense<0.000000e+00> : vector<2x8xf32>
    %14 = vector.multi_reduction <add>, %13, %cst_8 [2] : vector<2x8x32xf32> to vector<2x8xf32>
    %cst_9 = arith.constant dense<0xFF800000> : vector<2xf32>
    %15 = vector.multi_reduction <maximumf>, %14, %cst_9 [1] : vector<2x8xf32> to vector<2xf32>
    %16 = vector.shape_cast %15 : vector<2xf32> to vector<2x1xf32>
    %17 = vector.broadcast %16 : vector<2x1xf32> to vector<2x8xf32>
    %18 = arith.subf %14, %17 : vector<2x8xf32>
    %19 = math.exp %18 : vector<2x8xf32>
    %cst_10 = arith.constant dense<0.000000e+00> : vector<2xf32>
    %20 = vector.multi_reduction <add>, %19, %cst_10 [1] : vector<2x8xf32> to vector<2xf32>
    %21 = vector.shape_cast %20 : vector<2xf32> to vector<2x1xf32>
    %22 = tpu.reciprocal %21 {approx = true} : vector<2x1xf32> -> vector<2x1xf32>
    %23 = arith.mulf %21, %22 : vector<2x1xf32>
    %cst_11 = arith.constant 2.000000e+00 : f32
    %24 = vector.broadcast %cst_11 : f32 to vector<2x1xf32>
    %25 = arith.subf %24, %23 : vector<2x1xf32>
    %26 = arith.mulf %22, %25 : vector<2x1xf32>
    %27 = vector.broadcast %26 : vector<2x1xf32> to vector<2x8xf32>
    %28 = arith.mulf %19, %27 : vector<2x8xf32>
    %29 = arith.mulf %28, %10 : vector<2x8xf32>
    %c24 = arith.constant 24 : index
    %c0_12 = arith.constant 0 : index
    %30 = vector.load %arg2[%c24, %c0_12] : memref<80x128xf32, #tpu.memory_space<vmem>>, vector<8x32xf32>
    %c32 = arith.constant 32 : index
    %c0_13 = arith.constant 0 : index
    %31 = vector.load %arg2[%c32, %c0_13] : memref<80x128xf32, #tpu.memory_space<vmem>>, vector<1x32xf32>
    %cst_14 = arith.constant dense<0.000000e+00> : vector<2x32xf32>
    %32 = tpu.matmul %29, %30, %cst_14 {dimension_numbers = #tpu.dot_dimension_numbers<[1], [0], [0], [1], [0, 0, 1, 1], [], []>} : vector<2x8xf32>, vector<8x32xf32>, vector<2x32xf32> -> vector<2x32xf32>
    %33 = vector.broadcast %31 : vector<1x32xf32> to vector<2x32xf32>
    %34 = arith.addf %32, %33 : vector<2x32xf32>
    %cst_15 = arith.constant 0.000000e+00 : f32
    %35 = vector.broadcast %cst_15 : f32 to vector<2x32xf32>
    %36 = arith.maximumf %34, %35 : vector<2x32xf32>
    %c40 = arith.constant 40 : index
    %c0_16 = arith.constant 0 : index
    %37 = vector.load %arg2[%c40, %c0_16] : memref<80x128xf32, #tpu.memory_space<vmem>>, vector<32x16xf32>
    %c72 = arith.constant 72 : index
    %c0_17 = arith.constant 0 : index
    %38 = vector.load %arg2[%c72, %c0_17] : memref<80x128xf32, #tpu.memory_space<vmem>>, vector<1x16xf32>
    %cst_18 = arith.constant dense<0.000000e+00> : vector<2x16xf32>
    %39 = tpu.matmul %36, %37, %cst_18 {dimension_numbers = #tpu.dot_dimension_numbers<[1], [0], [0], [1], [0, 0, 1, 1], [], []>} : vector<2x32xf32>, vector<32x16xf32>, vector<2x16xf32> -> vector<2x16xf32>
    %40 = vector.broadcast %38 : vector<1x16xf32> to vector<2x16xf32>
    %41 = arith.addf %39, %40 : vector<2x16xf32>
    %cst_19 = arith.constant 0.000000e+00 : f32
    %42 = vector.broadcast %cst_19 : f32 to vector<2x16xf32>
    %43 = arith.maximumf %41, %42 : vector<2x16xf32>
    %c74 = arith.constant 74 : index
    %c0_20 = arith.constant 0 : index
    %44 = vector.load %arg2[%c74, %c0_20] : memref<80x128xf32, #tpu.memory_space<vmem>>, vector<1x80xf32>
    %c73 = arith.constant 73 : index
    %c0_21 = arith.constant 0 : index
    %45 = vector.load %arg2[%c73, %c0_21] : memref<80x128xf32, #tpu.memory_space<vmem>>, vector<1x16xf32>
    %c75 = arith.constant 75 : index
    %c0_22 = arith.constant 0 : index
    %46 = vector.load %arg2[%c75, %c0_22] : memref<80x128xf32, #tpu.memory_space<vmem>>, vector<1x1xf32>
    %47 = vector.broadcast %44 : vector<1x80xf32> to vector<2x80xf32>
    %48 = arith.mulf %1, %47 : vector<2x80xf32>
    %cst_23 = arith.constant dense<0.000000e+00> : vector<2xf32>
    %49 = vector.multi_reduction <add>, %48, %cst_23 [1] : vector<2x80xf32> to vector<2xf32>
    %50 = vector.shape_cast %49 : vector<2xf32> to vector<2x1xf32>
    %51 = vector.broadcast %45 : vector<1x16xf32> to vector<2x16xf32>
    %52 = arith.mulf %43, %51 : vector<2x16xf32>
    %cst_24 = arith.constant dense<0.000000e+00> : vector<2xf32>
    %53 = vector.multi_reduction <add>, %52, %cst_24 [1] : vector<2x16xf32> to vector<2xf32>
    %54 = vector.shape_cast %53 : vector<2xf32> to vector<2x1xf32>
    %55 = arith.addf %50, %54 : vector<2x1xf32>
    %56 = vector.broadcast %46 : vector<1x1xf32> to vector<2x1xf32>
    %57 = arith.addf %55, %56 : vector<2x1xf32>
    %cst_25 = arith.constant 0.000000e+00 : f32
    %58 = vector.broadcast %cst_25 : f32 to vector<2x119xf32>
    %59 = tpu.concatenate %28, %57, %58 in 1 : vector<2x8xf32>, vector<2x1xf32>, vector<2x119xf32> -> vector<2x128xf32>
    %cst_26 = arith.constant 0.000000e+00 : f32
    %60 = vector.broadcast %cst_26 : f32 to vector<6x128xf32>
    %61 = tpu.concatenate %59, %60 in 0 : vector<2x128xf32>, vector<6x128xf32> -> vector<8x128xf32>
    %c0_27 = arith.constant 0 : index
    %c0_28 = arith.constant 0 : index
    %62 = vector.load %arg3[%c0_27, %c0_28] : memref<8x128xf32, #tpu.memory_space<vmem>>, vector<8x128xf32>
    tpu.vector_store %arg3[%c0_27, %c0_28], %61 {strides = array<i32>} : memref<8x128xf32, #tpu.memory_space<vmem>>, vector<8x128xf32>,
    return
  }
}

</mosaic_0001>

<llo_original>
// kernel: model_forward.1
$region0: #{model_forward.1}
  #allocation0 [shape = 'u32[]', space=smem, size = 0x4, offset = 0x4, fixed_abs, tag = 'smem constant byte address 0x4 - core index']
  #allocation1 [shape = 'u32[72,128]{1,0:T(1,128)}', space=vmem, size = 0x9000, scoped, tag = 'internal scratch']
  %s0 = inlined_call_operand.vmem [shape: f32[16,17], index: 0, kind: input, shape index: {}]
  %s1 = inlined_call_operand.vmem [shape: f32[2,80], index: 1, kind: input, shape index: {}]
  %s2 = inlined_call_operand.hbm [shape: f32[80,128], index: 2, kind: input, shape index: {}]
  %s3 = inlined_call_operand.vmem [shape: f32[8,128], index: 3, kind: output, shape index: {}]
  %s4 = sld [smem:[#allocation0]]
  $region26: #{model_forward.1} parent=0
    _
  %s6 = ssub.s32 1, %s4
  %s7 = scalar_select 0, %s6, %s4
  $region1: #{model_forward.1} parent=0
    #allocation2 [shape = 'u8[40960]{0}', space=vmem, size = 0xa000, scoped, tag = 'input window, operand 2, single buffered']
    #allocation3 [shape = 's32[1]{0}', space=sflag, size = 0x4, scoped, tag = 'scoped memory for model_forward.1']
    %8 = vsyncpa [#allocation3], 0
    // Predicated region
    $region2: #{model_forward.1} parent=1 // pred_check
      _
    $region3: #{model_forward.1} parent=1 // pred_check_branch
      %10 = sbr.rel (0) target = $region5
    $region4: #{model_forward.1} parent=1 // pred_region
      _
    $region5: #{model_forward.1} parent=1 // pred_fallthru
      _
    // Predicated region
    $region6: #{model_forward.1} parent=1 // pred_check
      _
    $region7: #{model_forward.1} parent=1 // pred_check_branch
      %12 = sbr.rel (0) target = $region9
    $region8: #{model_forward.1} parent=1 // pred_region
      _
    $region9: #{model_forward.1} parent=1 // pred_fallthru
      _
    // Predicated region
    $region10: #{model_forward.1} parent=1 // pred_check
      _
    $region11: #{model_forward.1} parent=1 // pred_check_branch
      %14 = sbr.rel (0) target = $region13
    $region12: #{model_forward.1} parent=1 // pred_region
      %16 = vsyncadd [#allocation3], 0
      %s17 = sshll.u32 %s2, 4
      %s18 = int_to_ptr.hbm [resolvable:$true] %s17
      %s19 = sshll.u32 [#allocation2], 4
      %s20 = int_to_ptr.vmem [resolvable:$true] %s19
      %25 = dma.hbm_to_vmem [thread:$0]  %s18, 1280, %s20, [#allocation3], 128, 128, 8
    $region13: #{model_forward.1} parent=1 // pred_fallthru
      _
    // Predicated region
    $region14: #{model_forward.1} parent=1 // pred_check
      _
    $region15: #{model_forward.1} parent=1 // pred_check_branch
      %27 = sbr.rel (0) target = $region17
    $region16: #{model_forward.1} parent=1 // pred_region
      %29 = dma.done [#allocation3], 1280
    $region17: #{model_forward.1} parent=1 // pred_fallthru
      _
    %v30 = vld [vmem:[%s0] sm:$0xff]
    %v31 = vld [vmem:[%s0 + $0x8] sm:$0xff]
    %v32 = vld [vmem:[%s1] sm:$0x3]
    %v33 = vld [vmem:[#allocation2] sm:$0xff]
    %v34 = vld [vmem:[#allocation2 + $0x8] sm:$0xff]
    %v35 = vld [vmem:[#allocation2 + $0x10] sm:$0x1]
    %v36 = vld [vmem:[#allocation2 + $0x11] sm:$0x1]
    %vm37 = vcmask 138240
    %v39 = vsel %vm37, %v30, 0
    %v42 = vsel %vm37, %v31, 0
    %vm44 = vcmask 1040384
    %v46 = vsel %vm44, %v35, 0
    %48 = vmatpush.msra.mxu0 0.0
    %49 = vmatpush.msra.mxu0 0.0
    %50 = vmatpush.msra.mxu0 0.0
    %51 = vmatpush.msra.mxu0 0.0
    %52 = vmatpush.msra.mxu0 0.0
    %53 = vmatpush.msra.mxu0 0.0
    %54 = vmatpush.msra.mxu0 0.0
    %55 = vmatpush.msra.mxu0 0.0
    %56 = vmatpush.msra.mxu0 0.0
    %57 = vmatpush.msra.mxu0 0.0
    %58 = vmatpush.msra.mxu0 0.0
    %59 = vmatpush.msra.mxu0 0.0
    %60 = vmatpush.msra.mxu0 0.0
    %61 = vmatpush.msra.mxu0 %v46
    %62 = vmatpush.msra.mxu0 %v34
    %63 = vmatpush.msra.mxu0 %v33
    %64 = vmatmul.f32.gmra.mxu0 %v39
    %v65 = vpop.f32.mrf.mxu0
    %v66 = vadd.f32 0.0, %v65
    %67 = vmatmul.f32.gmra.mxu0 %v42
    %v68 = vpop.f32.mrf.mxu0
    %v69 = vadd.f32 0.0, %v68
    %70 = vdwg.mxu0
    %v71 = vmax.f32 %v66, 0.0
    %v72 = vmax.f32 %v69, 0.0
    %v73 = vadd.f32 %v66, 0.0
    %v74 = vadd.f32 %v69, 0.0
    %v75 = vperm.slane %v36, 0
    %v76 = vmul.f32 %v71, %v75
    %v77 = vmul.f32 %v72, %v75
    %vm78 = vcmask 261120
    %v79 = vsel %vm78, %v76, 0.0
    %80 = vadd.xlane.f32.xlu0 %v79
    %v81 = vpop.xlane.xlu0 %80
    %v82 = vsel %vm78, %v77, 0.0
    %83 = vadd.xlane.f32.xlu0 %v82
    %v84 = vpop.xlane.xlu0 %83
    %v87 = vlaneseq
    %v88 = vand.u32 %v87, 127
    %v89 = vperm.slane %v81, %v88
    %v90 = vperm.slane %v84, %v88
    %vm91 = vcmask 1041409
    %v92 = vsel %vm91, %v90, %v89
    %vm94 = vcmask 58368
    %v95 = vsel %vm94, %v92, -inf
    %96 = vmax.xlane.f32.xlu0 %v95
    %v97 = vpop.xlane.xlu0 %96
    %v99 = vperm.slane %v97, 0
    %v100 = vperm.slane %v97, 1
    %v103 = vsub.f32 %v81, %v99
    %v104 = vsub.f32 %v84, %v100
    %v105 = vmul.f32 %v103, 1.442695
    %v106 = vpow.pop %v105
    %v107 = vmul.f32 %v104, 1.442695
    %v108 = vpow.pop %v107
    %111 = vset.pattern.permute.xlu0 0
    %112 = vperm.xlu0 %111, %v106
    %v113 = vpop.permute.xlu0 %112
    %114 = vset.pattern.permute.xlu0 0
    %115 = vperm.xlu0 %114, %v108
    %v116 = vpop.permute.xlu0 %115
    %v117 = vperm.slane %v113, %v88
    %v118 = vperm.slane %v116, %v88
    %v119 = vsel %vm91, %v118, %v117
    %v121 = vsel %vm94, %v119, 0.0
    %122 = vadd.xlane.f32.xlu0 %v121
    %v123 = vpop.xlane.xlu0 %122
    %v124 = vrcp.pop %v123
    %v125 = vmul.f32 %v123, %v124
    %v126 = vsub.f32 2.0, %v125
    %v127 = vmul.f32 %v124, %v126
    %v129 = vperm.slane %v127, 0
    %v130 = vperm.slane %v127, 1
    %v133 = vmul.f32 %v106, %v129
    %v134 = vmul.f32 %v108, %v130
    %137 = vrot.lane.b32.xlu0 %v73, 96
    %v138 = vpop.permute.xlu0 %137
    %139 = vrot.lane.b32.xlu0 %v74, 96
    %v140 = vpop.permute.xlu0 %139
    %v143 = vmul.f32 %v133, %v138
    %v144 = vmul.f32 %v134, %v140
    %v145 = vld [vmem:[#allocation2 + $0x18] sm:$0xff]
    %v146 = vld [vmem:[#allocation2 + $0x20] sm:$0x1]
    %v147 = vperm.slane %v146, 0
    %150 = vset.pattern.permute.xlu0 0
    %151 = vperm.xlu0 %150, %v143
    %v152 = vpop.permute.xlu0 %151
    %153 = vset.pattern.permute.xlu0 0
    %154 = vperm.xlu0 %153, %v144
    %v155 = vpop.permute.xlu0 %154
    %v156 = vperm.slane %v152, %v88
    %v157 = vperm.slane %v155, %v88
    %v158 = vsel %vm91, %v157, %v156
    %vm159 = vcmask 64512
    %v160 = vsel %vm159, %v158, 0
    %162 = vmatpush.msra.mxu0 0.0
    %163 = vmatpush.msra.mxu0 0.0
    %164 = vmatpush.msra.mxu0 0.0
    %165 = vmatpush.msra.mxu0 0.0
    %166 = vmatpush.msra.mxu0 0.0
    %167 = vmatpush.msra.mxu0 0.0
    %168 = vmatpush.msra.mxu0 0.0
    %169 = vmatpush.msra.mxu0 0.0
    %170 = vmatpush.msra.mxu0 0.0
    %171 = vmatpush.msra.mxu0 0.0
    %172 = vmatpush.msra.mxu0 0.0
    %173 = vmatpush.msra.mxu0 0.0
    %174 = vmatpush.msra.mxu0 0.0
    %175 = vmatpush.msra.mxu0 0.0
    %176 = vmatpush.msra.mxu0 0.0
    %177 = vmatpush.msra.mxu0 %v145
    %178 = vmatmul.f32.gmra.mxu0 %v160
    %v179 = vpop.f32.mrf.mxu0
    %v180 = vadd.f32 %v147, %v179
    %181 = vdwg.mxu0
    %v182 = vmax.f32 %v180, 0.0
    %v183 = vld [vmem:[#allocation2 + $0x28] sm:$0xff]
    %v184 = vld [vmem:[#allocation2 + $0x30] sm:$0xff]
    %v185 = vld [vmem:[#allocation2 + $0x38] sm:$0xff]
    %v186 = vld [vmem:[#allocation2 + $0x40] sm:$0xff]
    %v187 = vld [vmem:[#allocation2 + $0x48] sm:$0x1]
    %v188 = vperm.slane %v187, 0
    %v190 = vsel %vm78, %v182, 0
    %192 = vmatpush.msra.mxu0 0.0
    %193 = vmatpush.msra.mxu0 0.0
    %194 = vmatpush.msra.mxu0 0.0
    %195 = vmatpush.msra.mxu0 0.0
    %196 = vmatpush.msra.mxu0 0.0
    %197 = vmatpush.msra.mxu0 0.0
    %198 = vmatpush.msra.mxu0 0.0
    %199 = vmatpush.msra.mxu0 0.0
    %200 = vmatpush.msra.mxu0 0.0
    %201 = vmatpush.msra.mxu0 0.0
    %202 = vmatpush.msra.mxu0 0.0
    %203 = vmatpush.msra.mxu0 0.0
    %204 = vmatpush.msra.mxu0 %v186
    %205 = vmatpush.msra.mxu0 %v185
    %206 = vmatpush.msra.mxu0 %v184
    %207 = vmatpush.msra.mxu0 %v183
    %208 = vmatmul.f32.gmra.mxu0 %v190
    %v209 = vpop.f32.mrf.mxu0
    %v210 = vadd.f32 %v188, %v209
    %211 = vdwg.mxu0
    %v212 = vmax.f32 %v210, 0.0
    %v213 = vld [vmem:[#allocation2 + $0x4a] sm:$0x1]
    %v214 = vld [vmem:[#allocation2 + $0x49] sm:$0x1]
    %v215 = vld [vmem:[#allocation2 + $0x4b] sm:$0x1]
    %v216 = vperm.slane %v213, 0
    %v217 = vmul.f32 %v32, %v216
    %vm218 = vcmask 648192
    %v219 = vsel %vm218, %v217, 0.0
    %220 = vadd.xlane.f32.xlu0 %v219
    %v221 = vpop.xlane.xlu0 %220
    %v222 = vperm.slane %v214, 0
    %v223 = vmul.f32 %v212, %v222
    %vm224 = vcmask 123904
    %v225 = vsel %vm224, %v223, 0.0
    %226 = vadd.xlane.f32.xlu0 %v225
    %v227 = vpop.xlane.xlu0 %226
    %v228 = vadd.f32 %v221, %v227
    %v229 = vperm.slane %v215, 0
    %v230 = vadd.f32 %v228, %v229
    %233 = vset.pattern.permute.xlu0 0
    %234 = vperm.xlu0 %233, %v133
    %v235 = vpop.permute.xlu0 %234
    %236 = vset.pattern.permute.xlu0 0
    %237 = vperm.xlu0 %236, %v134
    %v238 = vpop.permute.xlu0 %237
    %v239 = vperm.slane %v235, %v88
    %v240 = vperm.slane %v238, %v88
    %v241 = vsel %vm91, %v240, %v239
    %244 = vrot.lane.b32.xlu0 %v230, 8
    %v245 = vpop.permute.xlu0 %244
    %v247 = vsel %vm159, %v241, %v245
    %vm248 = vcmask 72704
    %v249 = vsel %vm248, %v247, 0.0
    %vm250 = vcmask 1041408
    %v251 = vsel %vm250, %v249, 0.0
    %252 = vst [vmem:[%s3] sm:$0xff] %v251
    // Predicated region
    $region18: #{model_forward.1} parent=1 // pred_check
      _
    $region19: #{model_forward.1} parent=1 // pred_check_branch
      %254 = sbr.rel (0) target = $region21
    $region20: #{model_forward.1} parent=1 // pred_region
      _
    $region21: #{model_forward.1} parent=1 // pred_fallthru
      _
    // Predicated region
    $region22: #{model_forward.1} parent=1 // pred_check
      _
    $region23: #{model_forward.1} parent=1 // pred_check_branch
      %256 = sbr.rel (0) target = $region25
    $region24: #{model_forward.1} parent=1 // pred_region
      _
    $region25: #{model_forward.1} parent=1 // pred_fallthru
      _
    %257 = vsyncpa [#allocation3], 1

</llo_original>
